<compile_context>
chip_gen: v6e
topology: v6e:2x2x1
jax: 0.10.0
libtpu: 0.0.40
codegen_flags: <defaults>
</compile_context>

<pallas_src>
import jax
import jax.numpy as jnp
from jax.experimental import pallas as pl
from jax.experimental.pallas import tpu as pltpu


def _round_up(a: int, b: int) -> int:
    return ((a + b - 1) // b) * b


def mlp_kernel(x_ref, w1_ref, b1_ref, w2_ref, b2_ref, o_ref, acc_ref):
    # x_ref:  (tm, C)   w1_ref: (C, th)   b1_ref: (1, th)
    # w2_ref: (th, C)   b2_ref: (1, C)    o_ref:  (tm, C)   acc_ref: (tm, C) f32
    k = pl.program_id(1)

    @pl.when(k == 0)
    def _init():
        acc_ref[...] = jnp.zeros_like(acc_ref)

    # First matmul slice (MXU, f32 accumulation) + fused bias / relu^2 (VPU).
    h = jnp.dot(x_ref[...], w1_ref[...], preferred_element_type=jnp.float32)
    h = h + b1_ref[...]                       # broadcast (1, th) over rows
    h = jnp.maximum(h, 0.0)                   # F.relu
    h = h * h                                 # .square()

    # Second matmul: accumulate this H-slice's contribution to the output.
    acc_ref[...] += jnp.dot(h.astype(w2_ref.dtype), w2_ref[...],
                            preferred_element_type=jnp.float32)

    @pl.when(k == pl.num_programs(1) - 1)
    def _finalize():
        o_ref[...] = (acc_ref[...] + b2_ref[...]).astype(o_ref.dtype)


def mlp_forward(x, w_fc, b_fc, w_proj, b_proj, *, tm=256, th=512,
                compute_dtype=jnp.bfloat16):
    """x: (B, T, C); w_fc: (C, 4C); b_fc: (4C,); w_proj: (4C, C); b_proj: (C,)."""
    B, T, C = x.shape
    H = w_fc.shape[1]
    M = B * T
    out_dtype = x.dtype

    # Tile selection: shrink tiles for small problems, pad ragged dims up
    # (no hard divisibility assert -> never forced back to tiny tiles).
    tm = max(8, min(tm, _round_up(M, 8)))
    th = max(128, min(th, _round_up(H, 128)))
    Mp = _round_up(M, tm)
    Hp = _round_up(H, th)

    xf = x.reshape(M, C)
    if Mp != M:
        xf = jnp.pad(xf, ((0, Mp - M), (0, 0)))
    w1, b1, w2 = w_fc, b_fc, w_proj
    if Hp != H:
        # Zero-padding the hidden dim is exact: relu(0 + 0)^2 = 0 contributes 0.
        w1 = jnp.pad(w1, ((0, 0), (0, Hp - H)))
        b1 = jnp.pad(b1, ((0, Hp - H),))
        w2 = jnp.pad(w2, ((0, Hp - H), (0, 0)))

    xf = xf.astype(compute_dtype)
    w1 = w1.astype(compute_dtype)
    w2 = w2.astype(compute_dtype)
    b1 = b1.reshape(1, Hp).astype(jnp.float32)
    b2 = b_proj.reshape(1, C).astype(jnp.float32)

    grid = (Mp // tm, Hp // th)

    in_bytes = jnp.dtype(compute_dtype).itemsize
    out_bytes = jnp.dtype(out_dtype).itemsize
    # Double-buffered blocks + f32 accumulator + live (tm, th) intermediate;
    # used to set an explicit scoped-VMEM limit with headroom (capped at 64 MiB
    # so it also fits v7x physical VMEM).
    vmem_est = (2 * tm * C * in_bytes          # x tiles
                + 2 * C * th * in_bytes        # W_fc H-slice
                + 2 * th * 4                   # b_fc H-slice
                + 2 * th * C * in_bytes        # W_proj H-slice
                + 2 * C * 4                    # b_proj
                + 2 * tm * C * out_bytes       # out tiles
                + tm * C * 4                   # accumulator scratch
                + tm * th * 4)                 # intermediate h slice
    vmem_limit = int(min(64 * 2**20, max(32 * 2**20, 2 * vmem_est)))

    flops = 2 * Mp * C * Hp * 2 + 3 * Mp * Hp
    bytes_accessed = (xf.size * in_bytes + w1.size * in_bytes
                      + w2.size * in_bytes + b1.size * 4 + b2.size * 4
                      + Mp * C * out_bytes)

    out = pl.pallas_call(
        mlp_kernel,
        out_shape=jax.ShapeDtypeStruct((Mp, C), out_dtype),
        grid_spec=pltpu.PrefetchScalarGridSpec(
            num_scalar_prefetch=0,
            grid=grid,
            in_specs=[
                pl.BlockSpec((tm, C), lambda i, k: (i, 0)),   # x row tile
                pl.BlockSpec((C, th), lambda i, k: (0, k)),   # W_fc H-slice
                pl.BlockSpec((1, th), lambda i, k: (0, k)),   # b_fc H-slice
                pl.BlockSpec((th, C), lambda i, k: (k, 0)),   # W_proj H-slice
                pl.BlockSpec((1, C), lambda i, k: (0, 0)),    # b_proj
            ],
            out_specs=pl.BlockSpec((tm, C), lambda i, k: (i, 0)),
            scratch_shapes=[pltpu.VMEM((tm, C), jnp.float32)],
        ),
        compiler_params=pltpu.CompilerParams(
            dimension_semantics=("parallel", "arbitrary"),
            vmem_limit_bytes=vmem_limit,
        ),
        cost_estimate=pl.CostEstimate(
            flops=flops, transcendentals=0, bytes_accessed=bytes_accessed),
    )(xf, w1, b1, w2, b2)

    return out[:M].reshape(B, T, C)


if __name__ == "__main__":
    # Small GPT-like config with a lane-dense (multiple-of-128) embedding dim.
    B, T, C = 2, 64, 128
    H = 4 * C  # 512

    key = jax.random.PRNGKey(0)
    kx, kw1, kb1, kw2, kb2 = jax.random.split(key, 5)

    x = jax.random.normal(kx, (B, T, C), dtype=jnp.float32)
    # PyTorch-Linear-like init scale 1/sqrt(fan_in).
    w_fc = jax.random.uniform(kw1, (C, H), jnp.float32, -1.0, 1.0) / jnp.sqrt(C)
    b_fc = jax.random.uniform(kb1, (H,), jnp.float32, -1.0, 1.0) / jnp.sqrt(C)
    w_proj = jax.random.uniform(kw2, (H, C), jnp.float32, -1.0, 1.0) / jnp.sqrt(H)
    b_proj = jax.random.uniform(kb2, (C,), jnp.float32, -1.0, 1.0) / jnp.sqrt(H)

    # Small tiles so the (M-tile, H-tile) grid and the accumulator path are
    # actually exercised (grid = (2, 4)); production defaults are tm=256/th=512.
    y = mlp_forward(x, w_fc, b_fc, w_proj, b_proj, tm=64, th=128)
    jax.block_until_ready(y)

    # Reference 1: same bf16 quantization of activations/weights with f32
    # accumulation (tight check on the kernel's arithmetic).
    xb = x.reshape(-1, C).astype(jnp.bfloat16)
    h_q = jnp.maximum(
        jnp.dot(xb, w_fc.astype(jnp.bfloat16),
                preferred_element_type=jnp.float32) + b_fc, 0.0) ** 2
    y_q = (jnp.dot(h_q.astype(jnp.bfloat16), w_proj.astype(jnp.bfloat16),
                   preferred_element_type=jnp.float32)
           + b_proj).reshape(B, T, C)
    assert jnp.allclose(y, y_q, atol=2e-3, rtol=2e-3), "mismatch vs bf16 reference"

    # Reference 2: full-f32 PyTorch-equivalent forward (loose tolerance to
    # absorb the bf16 cast).
    h_ref = jnp.maximum(x.reshape(-1, C) @ w_fc + b_fc, 0.0) ** 2
    y_ref = (h_ref @ w_proj + b_proj).reshape(B, T, C)
    assert jnp.allclose(y, y_ref, atol=6e-2, rtol=6e-2), "mismatch vs f32 reference"

    print("KERNEL_OK")
</pallas_src>

<mosaic_0001>
module attributes {stable_mosaic.version = 11 : i64} {
  func.func @mlp_kernel(%arg0: i32, %arg1: i32, %arg2: memref<64x128xbf16, #tpu.memory_space<vmem>>, %arg3: memref<128x128xbf16, #tpu.memory_space<vmem>>, %arg4: memref<1x128xf32, #tpu.memory_space<vmem>>, %arg5: memref<128x128xbf16, #tpu.memory_space<vmem>>, %arg6: memref<1x128xf32, #tpu.memory_space<vmem>>, %arg7: memref<64x128xf32, #tpu.memory_space<vmem>>, %arg8: memref<64x128xf32, #tpu.memory_space<vmem>>) attributes {dimension_semantics = [#tpu.dimension_semantics<parallel>, #tpu.dimension_semantics<arbitrary>], iteration_bounds = array<i64: 2, 4>, scalar_prefetch = 0 : i64, scratch_operands = 1 : i64, tpu.core_type = #tpu.core_type<tc>, window_params = [{transform_indices = @transform_0, window_bounds = array<i64: 64, 128>}, {transform_indices = @transform_1, window_bounds = array<i64: 128, 128>}, {transform_indices = @transform_2, window_bounds = array<i64: 1, 128>}, {transform_indices = @transform_3, window_bounds = array<i64: 128, 128>}, {pipeline_mode = #tpu.pipeline_mode<synchronous>, transform_indices = @transform_4, window_bounds = array<i64: 1, 128>}, {transform_indices = @transform_5, window_bounds = array<i64: 64, 128>}]} {
    %c0_i32 = arith.constant 0 : i32
    %0 = arith.cmpi eq, %arg1, %c0_i32 : i32
    %1 = arith.extui %0 : i1 to i32
    %c0_i32_0 = arith.constant 0 : i32
    %2 = arith.cmpi ne, %1, %c0_i32_0 : i32
    scf.if %2 {
      %cst_15 = arith.constant 0.000000e+00 : f32
      %21 = vector.broadcast %cst_15 : f32 to vector<64x128xf32>
      %c0_16 = arith.constant 0 : index
      %c0_17 = arith.constant 0 : index
      %22 = vector.load %arg8[%c0_16, %c0_17] : memref<64x128xf32, #tpu.memory_space<vmem>>, vector<64x128xf32>
      tpu.vector_store %arg8[%c0_16, %c0_17], %21 {strides = array<i32>} : memref<64x128xf32, #tpu.memory_space<vmem>>, vector<64x128xf32>,
    } else {
    }
    %c0 = arith.constant 0 : index
    %c0_1 = arith.constant 0 : index
    %3 = vector.load %arg2[%c0, %c0_1] : memref<64x128xbf16, #tpu.memory_space<vmem>>, vector<64x128xbf16>
    %c0_2 = arith.constant 0 : index
    %c0_3 = arith.constant 0 : index
    %4 = vector.load %arg3[%c0_2, %c0_3] : memref<128x128xbf16, #tpu.memory_space<vmem>>, vector<128x128xbf16>
    %cst = arith.constant dense<0.000000e+00> : vector<64x128xf32>
    %5 = tpu.matmul %3, %4, %cst {dimension_numbers = #tpu.dot_dimension_numbers<[1], [0], [0], [1], [0, 0, 1, 1], [], []>} : vector<64x128xbf16>, vector<128x128xbf16>, vector<64x128xf32> -> vector<64x128xf32>
    %c0_4 = arith.constant 0 : index
    %c0_5 = arith.constant 0 : index
    %6 = vector.load %arg4[%c0_4, %c0_5] : memref<1x128xf32, #tpu.memory_space<vmem>>, vector<1x128xf32>
    %7 = vector.broadcast %6 : vector<1x128xf32> to vector<64x128xf32>
    %8 = arith.addf %5, %7 : vector<64x128xf32>
    %cst_6 = arith.constant 0.000000e+00 : f32
    %9 = vector.broadcast %cst_6 : f32 to vector<64x128xf32>
    %10 = arith.maximumf %8, %9 : vector<64x128xf32>
    %11 = arith.mulf %10, %10 : vector<64x128xf32>
    %c0_7 = arith.constant 0 : index
    %c0_8 = arith.constant 0 : index
    %12 = vector.load %arg8[%c0_7, %c0_8] : memref<64x128xf32, #tpu.memory_space<vmem>>, vector<64x128xf32>
    %13 = arith.truncf %11 : vector<64x128xf32> to vector<64x128xbf16>
    %c0_9 = arith.constant 0 : index
    %c0_10 = arith.constant 0 : index
    %14 = vector.load %arg5[%c0_9, %c0_10] : memref<128x128xbf16, #tpu.memory_space<vmem>>, vector<128x128xbf16>
    %cst_11 = arith.constant dense<0.000000e+00> : vector<64x128xf32>
    %15 = tpu.matmul %13, %14, %cst_11 {dimension_numbers = #tpu.dot_dimension_numbers<[1], [0], [0], [1], [0, 0, 1, 1], [], []>} : vector<64x128xbf16>, vector<128x128xbf16>, vector<64x128xf32> -> vector<64x128xf32>
    %16 = arith.addf %12, %15 : vector<64x128xf32>
    %c0_12 = arith.constant 0 : index
    %c0_13 = arith.constant 0 : index
    %17 = vector.load %arg8[%c0_12, %c0_13] : memref<64x128xf32, #tpu.memory_space<vmem>>, vector<64x128xf32>
    tpu.vector_store %arg8[%c0_12, %c0_13], %16 {strides = array<i32>} : memref<64x128xf32, #tpu.memory_space<vmem>>, vector<64x128xf32>,
    %c3_i32 = arith.constant 3 : i32
    %18 = arith.cmpi eq, %arg1, %c3_i32 : i32
    %19 = arith.extui %18 : i1 to i32
    %c0_i32_14 = arith.constant 0 : i32
    %20 = arith.cmpi ne, %19, %c0_i32_14 : i32
    scf.if %20 {
      %c0_15 = arith.constant 0 : index
      %c0_16 = arith.constant 0 : index
      %21 = vector.load %arg8[%c0_15, %c0_16] : memref<64x128xf32, #tpu.memory_space<vmem>>, vector<64x128xf32>
      %c0_17 = arith.constant 0 : index
      %c0_18 = arith.constant 0 : index
      %22 = vector.load %arg6[%c0_17, %c0_18] : memref<1x128xf32, #tpu.memory_space<vmem>>, vector<1x128xf32>
      %23 = vector.broadcast %22 : vector<1x128xf32> to vector<64x128xf32>
      %24 = arith.addf %21, %23 : vector<64x128xf32>
      %c0_19 = arith.constant 0 : index
      %c0_20 = arith.constant 0 : index
      %25 = vector.load %arg7[%c0_19, %c0_20] : memref<64x128xf32, #tpu.memory_space<vmem>>, vector<64x128xf32>
      tpu.vector_store %arg7[%c0_19, %c0_20], %24 {strides = array<i32>} : memref<64x128xf32, #tpu.memory_space<vmem>>, vector<64x128xf32>,
    } else {
    }
    return
  }
  func.func @transform_0(%arg0: i32, %arg1: i32) -> (i32, i32) {
    %c0_i32 = arith.constant 0 : i32
    %c0_i32_0 = arith.constant 0 : i32
    return %arg0, %c0_i32 : i32, i32
  }
  func.func @transform_1(%arg0: i32, %arg1: i32) -> (i32, i32) {
    %c0_i32 = arith.constant 0 : i32
    %c0_i32_0 = arith.constant 0 : i32
    return %c0_i32, %arg1 : i32, i32
  }
  func.func @transform_2(%arg0: i32, %arg1: i32) -> (i32, i32) {
    %c0_i32 = arith.constant 0 : i32
    %c0_i32_0 = arith.constant 0 : i32
    return %c0_i32, %arg1 : i32, i32
  }
  func.func @transform_3(%arg0: i32, %arg1: i32) -> (i32, i32) {
    %c0_i32 = arith.constant 0 : i32
    %c0_i32_0 = arith.constant 0 : i32
    return %arg1, %c0_i32 : i32, i32
  }
  func.func @transform_4(%arg0: i32, %arg1: i32) -> (i32, i32) {
    %c0_i32 = arith.constant 0 : i32
    %c0_i32_0 = arith.constant 0 : i32
    %c0_i32_1 = arith.constant 0 : i32
    return %c0_i32, %c0_i32_0 : i32, i32
  }
  func.func @transform_5(%arg0: i32, %arg1: i32) -> (i32, i32) {
    %c0_i32 = arith.constant 0 : i32
    %c0_i32_0 = arith.constant 0 : i32
    return %arg0, %c0_i32 : i32, i32
  }
}

</mosaic_0001>

<llo_original>
// kernel: tpu_custom_call.1
$region0: #{tpu_custom_call.1}
  #allocation0 [shape = 'u32[]', space=smem, size = 0x4, offset = 0x4, fixed_abs, tag = 'smem constant byte address 0x4 - core index']
  #allocation1 [shape = 'u32[144,128]{1,0:T(1,128)}', space=vmem, size = 0x12000, scoped, tag = 'internal scratch']
  #allocation2 [shape = 'f32[64,128]{1,0:T(8,128)}', space=vmem, size = 0x8000, scoped, tag = 'scratch operand']
  %s0 = inlined_call_operand.hbm [shape: bf16[128,128], index: 0, kind: input, shape index: {}]
  %s1 = inlined_call_operand.hbm [shape: bf16[128,512], index: 1, kind: input, shape index: {}]
  %s2 = inlined_call_operand.hbm [shape: f32[1,512], index: 2, kind: input, shape index: {}]
  %s3 = inlined_call_operand.hbm [shape: bf16[512,128], index: 3, kind: input, shape index: {}]
  %s4 = inlined_call_operand.vmem [shape: f32[1,128], index: 4, kind: input, shape index: {}]
  %s5 = inlined_call_operand.hbm [shape: f32[128,128], index: 5, kind: output, shape index: {}]
  %s6 = sld [smem:[#allocation0]]
  $region77: #{tpu_custom_call.1} parent=0
    _
  %s8 = ssub.s32 1, %s6
  %s9 = scalar_select 0, %s8, %s6
  $region1: #{tpu_custom_call.1} parent=0
    #allocation3 [shape = 'u8[32768]{0}', space=vmem, size = 0x8000, scoped, tag = 'input window, operand 0']
    #allocation4 [shape = 's32[2]{0}', space=sflag, size = 0x8, scoped, tag = 'scoped memory for tpu_custom_call.1']
    #allocation5 [shape = 's32[2]{0}', space=sflag, size = 0x8, scoped, tag = 'scoped memory for tpu_custom_call.1']
    #allocation6 [shape = 'u8[65536]{0}', space=vmem, size = 0x10000, scoped, tag = 'input window, operand 1']
    #allocation7 [shape = 's32[2]{0}', space=sflag, size = 0x8, scoped, tag = 'scoped memory for tpu_custom_call.1']
    #allocation8 [shape = 'u8[1024]{0}', space=vmem, size = 0x400, scoped, tag = 'input window, operand 2']
    #allocation9 [shape = 'u8[65536]{0}', space=vmem, size = 0x10000, scoped, tag = 'input window, operand 3']
    #allocation10 [shape = 's32[2]{0}', space=sflag, size = 0x8, scoped, tag = 'scoped memory for tpu_custom_call.1']
    #allocation11 [shape = 'u8[65536]{0}', space=vmem, size = 0x10000, scoped, tag = 'output window, operand 0']
    %10 = vsyncpa [#allocation4], 0
    %s11 = scalar_lea.sflag [#allocation4], 1
    %12 = vsyncpa %s11, 0
    %13 = vsyncpa [#allocation7], 0
    %s14 = scalar_lea.sflag [#allocation7], 1
    %15 = vsyncpa %s14, 0
    %16 = vsyncpa [#allocation10], 0
    %s17 = scalar_lea.sflag [#allocation10], 1
    %18 = vsyncpa %s17, 0
    %19 = vsyncpa [#allocation5], 0
    %s20 = scalar_lea.sflag [#allocation5], 1
    %21 = vsyncpa %s20, 0
    loop: start=0, step=1, limit=10
    $region2: #{tpu_custom_call.1} parent=1 // loop_pre_header
      _
    $region3: #{tpu_custom_call.1} parent=1 // loop_header
      %s23 = sphi 0, %s27
      %p24 = scmp.ge.s32.totalorder %s23, 10
      %s30 = sphi 0, %s42
      %s31 = sphi 0, %s38
      %s32 = sphi 0, %s30
      %s33 = sphi 0, %s31
      %s34 = sphi 0, %s32
      %s35 = sphi 0, %s33
      %s45 = sphi 0, %s47
      %s48 = sphi 0, %s45
      %s49 = sphi 0, %s48
      %s65 = sphi 0, %s49
      %s71 = sphi 0, %s73
      %s74 = sphi 0, %s71
      %s75 = sphi 0, %s74
      %s91 = sphi 0, %s75
      %s97 = sphi 0, %s99
      %s100 = sphi 0, %s97
      %s101 = sphi 0, %s100
      %s117 = sphi 0, %s101
      %s123 = sphi 0, %s125
      %s126 = sphi 0, %s123
      %s127 = sphi 0, %s126
      %s143 = sphi 0, %s127
      %s147 = sphi 0, %s147
      %s149 = sphi 0, %s147
      %s150 = sphi 0, %s149
      %s164 = sphi 0, %s150
      %s170 = sphi 0, %s172
      %s173 = sphi 0, %s170
      %s174 = sphi 0, %s173
      %s190 = sphi 0, %s174
    $region4: #{tpu_custom_call.1} parent=1 // loop_header_branch
      %26 = sbr.rel (%p24) target = $region8
    $region5: #{tpu_custom_call.1} parent=1 // loop_body
      %s28 = ssub.s32 %s23, 1
      %s29 = ssub.s32 %s23, 2
      %s36 = sadd.s32 1, %s31
      %p37 = scmp.ge.s32.totalorder %s36, 4
      %s38 = scalar_select %p37, 0, %s36
      %s39 = sadd.s32 1, %s30
      %s40 = scalar_select %p37, %s39, %s30
      %p41 = scmp.ge.s32.totalorder %s40, 2
      %s42 = scalar_select %p41, 0, %s40
      %s43 = ssub.s32 %s30, %s42
      %p44 = scmp.eq.s32.totalorder %s43, 0
      %s46 = sadd.s32 %s45, 1
      %s47 = scalar_select %p44, %s45, %s46
      %p50 = pneg %p44
      %p51 = scmp.eq.s32.totalorder %s23, 7
      %p52 = por %p50, %p51
      %p53 = scmp.ne.s32.totalorder %s45, %s48
      %p54 = scmp.eq.s32.totalorder %s23, 0
      %p55 = por %p53, %p54
      %p56 = scmp.ne.s32.totalorder %s45, %s48
      %p57 = scmp.eq.s32.totalorder %s28, 7
      %p58 = por %p56, %p57
      %p59 = scmp.ne.s32.totalorder %s48, %s49
      %p60 = scmp.eq.s32.totalorder %s28, 0
      %p61 = por %p59, %p60
      %p62 = scmp.ne.s32.totalorder %s48, %s49
      %p63 = scmp.eq.s32.totalorder %s29, 7
      %p64 = por %p62, %p63
      %p66 = scmp.ne.s32.totalorder %s49, %s65
      %p67 = scmp.eq.s32.totalorder %s29, 0
      %p68 = por %p66, %p67
      %s69 = ssub.s32 %s31, %s38
      %p70 = scmp.eq.s32.totalorder %s69, 0
      %s72 = sadd.s32 %s71, 1
      %s73 = scalar_select %p70, %s71, %s72
      %p76 = pneg %p70
      %p77 = scmp.eq.s32.totalorder %s23, 7
      %p78 = por %p76, %p77
      %p79 = scmp.ne.s32.totalorder %s71, %s74
      %p80 = scmp.eq.s32.totalorder %s23, 0
      %p81 = por %p79, %p80
      %p82 = scmp.ne.s32.totalorder %s71, %s74
      %p83 = scmp.eq.s32.totalorder %s28, 7
      %p84 = por %p82, %p83
      %p85 = scmp.ne.s32.totalorder %s74, %s75
      %p86 = scmp.eq.s32.totalorder %s28, 0
      %p87 = por %p85, %p86
      %p88 = scmp.ne.s32.totalorder %s74, %s75
      %p89 = scmp.eq.s32.totalorder %s29, 7
      %p90 = por %p88, %p89
      %p92 = scmp.ne.s32.totalorder %s75, %s91
      %p93 = scmp.eq.s32.totalorder %s29, 0
      %p94 = por %p92, %p93
      %s95 = ssub.s32 %s31, %s38
      %p96 = scmp.eq.s32.totalorder %s95, 0
      %s98 = sadd.s32 %s97, 1
      %s99 = scalar_select %p96, %s97, %s98
      %p102 = pneg %p96
      %p103 = scmp.eq.s32.totalorder %s23, 7
      %p104 = por %p102, %p103
      %p105 = scmp.ne.s32.totalorder %s97, %s100
      %p106 = scmp.eq.s32.totalorder %s23, 0
      %p107 = por %p105, %p106
      %p108 = scmp.ne.s32.totalorder %s97, %s100
      %p109 = scmp.eq.s32.totalorder %s28, 7
      %p110 = por %p108, %p109
      %p111 = scmp.ne.s32.totalorder %s100, %s101
      %p112 = scmp.eq.s32.totalorder %s28, 0
      %p113 = por %p111, %p112
      %p114 = scmp.ne.s32.totalorder %s100, %s101
      %p115 = scmp.eq.s32.totalorder %s29, 7
      %p116 = por %p114, %p115
      %p118 = scmp.ne.s32.totalorder %s101, %s117
      %p119 = scmp.eq.s32.totalorder %s29, 0
      %p120 = por %p118, %p119
      %s121 = ssub.s32 %s31, %s38
      %p122 = scmp.eq.s32.totalorder %s121, 0
      %s124 = sadd.s32 %s123, 1
      %s125 = scalar_select %p122, %s123, %s124
      %p128 = pneg %p122
      %p129 = scmp.eq.s32.totalorder %s23, 7
      %p130 = por %p128, %p129
      %p131 = scmp.ne.s32.totalorder %s123, %s126
      %p132 = scmp.eq.s32.totalorder %s23, 0
      %p133 = por %p131, %p132
      %p134 = scmp.ne.s32.totalorder %s123, %s126
      %p135 = scmp.eq.s32.totalorder %s28, 7
      %p136 = por %p134, %p135
      %p137 = scmp.ne.s32.totalorder %s126, %s127
      %p138 = scmp.eq.s32.totalorder %s28, 0
      %p139 = por %p137, %p138
      %p140 = scmp.ne.s32.totalorder %s126, %s127
      %p141 = scmp.eq.s32.totalorder %s29, 7
      %p142 = por %p140, %p141
      %p144 = scmp.ne.s32.totalorder %s127, %s143
      %p145 = scmp.eq.s32.totalorder %s29, 0
      %p146 = por %p144, %p145
      %s148 = sadd.s32 %s147, 1
      %p151 = scmp.eq.s32.totalorder %s23, 7
      %p152 = scmp.ne.s32.totalorder %s147, %s149
      %p153 = scmp.eq.s32.totalorder %s23, 0
      %p154 = por %p152, %p153
      %p155 = scmp.ne.s32.totalorder %s147, %s149
      %p156 = scmp.eq.s32.totalorder %s28, 7
      %p157 = por %p155, %p156
      %p158 = scmp.ne.s32.totalorder %s149, %s150
      %p159 = scmp.eq.s32.totalorder %s28, 0
      %p160 = por %p158, %p159
      %p161 = scmp.ne.s32.totalorder %s149, %s150
      %p162 = scmp.eq.s32.totalorder %s29, 7
      %p163 = por %p161, %p162
      %p165 = scmp.ne.s32.totalorder %s150, %s164
      %p166 = scmp.eq.s32.totalorder %s29, 0
      %p167 = por %p165, %p166
      %s168 = ssub.s32 %s30, %s42
      %p169 = scmp.eq.s32.totalorder %s168, 0
      %s171 = sadd.s32 %s170, 1
      %s172 = scalar_select %p169, %s170, %s171
      %p175 = pneg %p169
      %p176 = scmp.eq.s32.totalorder %s23, 7
      %p177 = por %p175, %p176
      %p178 = scmp.ne.s32.totalorder %s170, %s173
      %p179 = scmp.eq.s32.totalorder %s23, 0
      %p180 = por %p178, %p179
      %p181 = scmp.ne.s32.totalorder %s170, %s173
      %p182 = scmp.eq.s32.totalorder %s28, 7
      %p183 = por %p181, %p182
      %p184 = scmp.ne.s32.totalorder %s173, %s174
      %p185 = scmp.eq.s32.totalorder %s28, 0
      %p186 = por %p184, %p185
      %p187 = scmp.ne.s32.totalorder %s173, %s174
      %p188 = scmp.eq.s32.totalorder %s29, 7
      %p189 = por %p187, %p188
      %p191 = scmp.ne.s32.totalorder %s174, %s190
      %p192 = scmp.eq.s32.totalorder %s29, 0
      %p193 = por %p191, %p192
      %p194 = scmp.le.s32.totalorder 1, %s23
      %p195 = scmp.lt.s32.totalorder %s23, 9
      %p196 = pnand %p194, %p195
      %p197 = pneg %p196
      // Predicated region
      $region9: #{tpu_custom_call.1} parent=5 // pred_check
        _
      $region10: #{tpu_custom_call.1} parent=5 // pred_check_branch
        %199 = sbr.rel (%p196) target = $region12
      $region11: #{tpu_custom_call.1} parent=5 // pred_region
        %s200 = ssub.s32 %s23, 1
        // Predicated region
        $region13: #{tpu_custom_call.1} parent=11 // pred_check
          %p201 = pneg %p160
        $region14: #{tpu_custom_call.1} parent=11 // pred_check_branch
          %203 = sbr.rel (%p201) target = $region16
        $region15: #{tpu_custom_call.1} parent=11 // pred_region
          _
        $region16: #{tpu_custom_call.1} parent=11 // pred_fallthru
          _
      $region12: #{tpu_custom_call.1} parent=5 // pred_fallthru
        _
      %p204 = scmp.lt.s32.totalorder %s23, 8
      // Predicated region
      $region17: #{tpu_custom_call.1} parent=5 // pred_check
        %p205 = pneg %p204
      $region18: #{tpu_custom_call.1} parent=5 // pred_check_branch
        %207 = sbr.rel (%p205) target = $region20
      $region19: #{tpu_custom_call.1} parent=5 // pred_region
        // Predicated region
        $region21: #{tpu_custom_call.1} parent=19 // pred_check
          %p208 = pneg %p55
        $region22: #{tpu_custom_call.1} parent=19 // pred_check_branch
          %210 = sbr.rel (%p208) target = $region24
        $region23: #{tpu_custom_call.1} parent=19 // pred_region
          %s211 = sand.u32 %s45, 1
          %s212 = scalar_lea.sflag [#allocation4], %s211
          %s213 = sand.u32 %s45, 1
          %s214 = smul.addr %s213, 32
          %s215 = scalar_lea.vmem [#allocation3], %s214
          %s216 = smul.u32 8, %s30
          %s218 = ssub.s32 512, 512
          %219 = vsyncadd %s212, %s218
          %s220 = smul.addr %s216, 64
          %s221 = scalar_lea.hbm %s0, %s220
          %s222 = sshll.u32 %s215, 4
          %s223 = int_to_ptr.vmem [resolvable:$true] %s222
          %228 = dma.hbm_to_vmem [thread:$0]  %s221, 512, %s223, %s212, 64, 64, 4
        $region24: #{tpu_custom_call.1} parent=19 // pred_fallthru
          _
        // Predicated region
        $region25: #{tpu_custom_call.1} parent=19 // pred_check
          %p229 = pneg %p81
        $region26: #{tpu_custom_call.1} parent=19 // pred_check_branch
          %231 = sbr.rel (%p229) target = $region28
        $region27: #{tpu_custom_call.1} parent=19 // pred_region
          %s232 = sand.u32 %s23, 1
          %s233 = scalar_lea.sflag [#allocation7], %s232
          %s234 = sand.u32 %s71, 1
          %s235 = smul.addr %s234, 64
          %s236 = scalar_lea.vmem [#allocation6], %s235
          %s238 = ssub.s32 1024, 1024
          %239 = vsyncadd %s233, %s238
          %s240 = smul.addr %s31, 64
          %s241 = scalar_lea.hbm %s1, %s240
          %s242 = sshll.u32 %s236, 4
          %s243 = int_to_ptr.vmem [resolvable:$true] %s242
          %248 = dma.hbm_to_vmem [thread:$0]  %s241, 1024, %s243, %s233, 256, 64, 4
        $region28: #{tpu_custom_call.1} parent=19 // pred_fallthru
          _
        // Predicated region
        $region29: #{tpu_custom_call.1} parent=19 // pred_check
          %p249 = pneg %p107
        $region30: #{tpu_custom_call.1} parent=19 // pred_check_branch
          %251 = sbr.rel (%p249) target = $region32
        $region31: #{tpu_custom_call.1} parent=19 // pred_region
          %s252 = sand.u32 %s23, 1
          %s253 = scalar_lea.sflag [#allocation7], %s252
          %s254 = sand.u32 %s97, 1
          %s255 = scalar_lea.vmem [#allocation8], %s254
          %s257 = ssub.s32 16, 16
          %258 = vsyncadd %s253, %s257
          %s259 = smul.addr %s31, 16
          %s260 = scalar_lea.hbm %s2, %s259
          %s262 = sshll.u32 %s255, 4
          %s263 = int_to_ptr.vmem [resolvable:$true] %s262
          %265 = dma.hbm_to_vmem [thread:$0]  %s260, 16, %s263, %s253
        $region32: #{tpu_custom_call.1} parent=19 // pred_fallthru
          _
        // Predicated region
        $region33: #{tpu_custom_call.1} parent=19 // pred_check
          %p266 = pneg %p133
        $region34: #{tpu_custom_call.1} parent=19 // pred_check_branch
          %268 = sbr.rel (%p266) target = $region36
        $region35: #{tpu_custom_call.1} parent=19 // pred_region
          %s269 = sand.u32 %s123, 1
          %s270 = scalar_lea.sflag [#allocation10], %s269
          %s271 = sand.u32 %s123, 1
          %s272 = smul.addr %s271, 64
          %s273 = scalar_lea.vmem [#allocation9], %s272
          %s274 = smul.u32 16, %s31
          %s276 = ssub.s32 1024, 1024
          %277 = vsyncadd %s270, %s276
          %s278 = smul.addr %s274, 64
          %s279 = scalar_lea.hbm %s3, %s278
          %s280 = sshll.u32 %s273, 4
          %s281 = int_to_ptr.vmem [resolvable:$true] %s280
          %286 = dma.hbm_to_vmem [thread:$0]  %s279, 1024, %s281, %s270, 64, 64, 4
        $region36: #{tpu_custom_call.1} parent=19 // pred_fallthru
          _
      $region20: #{tpu_custom_call.1} parent=5 // pred_fallthru
        _
      %p287 = scmp.le.s32.totalorder 1, %s23
      %p288 = scmp.lt.s32.totalorder %s23, 9
      %p289 = pnand %p287, %p288
      %p290 = pneg %p289
      // Predicated region
      $region37: #{tpu_custom_call.1} parent=5 // pred_check
        _
      $region38: #{tpu_custom_call.1} parent=5 // pred_check_branch
        %292 = sbr.rel (%p289) target = $region40
      $region39: #{tpu_custom_call.1} parent=5 // pred_region
        %s293 = ssub.s32 %s23, 1
        %s294 = sand.u32 %s48, 1
        %s295 = scalar_lea.sflag [#allocation4], %s294
        %s296 = sand.u32 %s48, 1
        %s297 = smul.addr %s296, 32
        %s298 = scalar_lea.vmem [#allocation3], %s297
        // Predicated region
        $region41: #{tpu_custom_call.1} parent=39 // pred_check
          %p299 = pneg %p61
        $region42: #{tpu_custom_call.1} parent=39 // pred_check_branch
          %301 = sbr.rel (%p299) target = $region44
        $region43: #{tpu_custom_call.1} parent=39 // pred_region
          %302 = dma.done %s295, 512
        $region44: #{tpu_custom_call.1} parent=39 // pred_fallthru
          _
        %s303 = sand.u32 %s28, 1
        %s304 = scalar_lea.sflag [#allocation7], %s303
        %s305 = sand.u32 %s74, 1
        %s306 = smul.addr %s305, 64
        %s307 = scalar_lea.vmem [#allocation6], %s306
        // Predicated region
        $region45: #{tpu_custom_call.1} parent=39 // pred_check
          %p308 = pneg %p87
        $region46: #{tpu_custom_call.1} parent=39 // pred_check_branch
          %310 = sbr.rel (%p308) target = $region48
        $region47: #{tpu_custom_call.1} parent=39 // pred_region
          %311 = dma.done %s304, 1024
        $region48: #{tpu_custom_call.1} parent=39 // pred_fallthru
          _
        %s312 = sand.u32 %s28, 1
        %s313 = scalar_lea.sflag [#allocation7], %s312
        %s314 = sand.u32 %s100, 1
        %s315 = scalar_lea.vmem [#allocation8], %s314
        // Predicated region
        $region49: #{tpu_custom_call.1} parent=39 // pred_check
          %p316 = pneg %p113
        $region50: #{tpu_custom_call.1} parent=39 // pred_check_branch
          %318 = sbr.rel (%p316) target = $region52
        $region51: #{tpu_custom_call.1} parent=39 // pred_region
          %319 = dma.done %s313, 16
        $region52: #{tpu_custom_call.1} parent=39 // pred_fallthru
          _
        %s320 = sand.u32 %s126, 1
        %s321 = scalar_lea.sflag [#allocation10], %s320
        %s322 = sand.u32 %s126, 1
        %s323 = smul.addr %s322, 64
        %s324 = scalar_lea.vmem [#allocation9], %s323
        // Predicated region
        $region53: #{tpu_custom_call.1} parent=39 // pred_check
          %p325 = pneg %p139
        $region54: #{tpu_custom_call.1} parent=39 // pred_check_branch
          %327 = sbr.rel (%p325) target = $region56
        $region55: #{tpu_custom_call.1} parent=39 // pred_region
          %328 = dma.done %s321, 1024
        $region56: #{tpu_custom_call.1} parent=39 // pred_fallthru
          _
        %s329 = sand.u32 %s48, 1
        %s330 = scalar_lea.sflag [#allocation4], %s329
        %s331 = sand.u32 %s48, 1
        %s332 = smul.addr %s331, 32
        %s333 = scalar_lea.vmem [#allocation3], %s332
        %p334 = pneg %p61
        %p335 = pneg %p58
        %s336 = sand.u32 %s28, 1
        %s337 = scalar_lea.sflag [#allocation7], %s336
        %s338 = sand.u32 %s74, 1
        %s339 = smul.addr %s338, 64
        %s340 = scalar_lea.vmem [#allocation6], %s339
        %p341 = pneg %p87
        %p342 = pneg %p84
        %s343 = sand.u32 %s28, 1
        %s344 = scalar_lea.sflag [#allocation7], %s343
        %s345 = sand.u32 %s100, 1
        %s346 = scalar_lea.vmem [#allocation8], %s345
        %p347 = pneg %p113
        %p348 = pneg %p110
        %s349 = sand.u32 %s126, 1
        %s350 = scalar_lea.sflag [#allocation10], %s349
        %s351 = sand.u32 %s126, 1
        %s352 = smul.addr %s351, 64
        %s353 = scalar_lea.vmem [#allocation9], %s352
        %p354 = pneg %p139
        %p355 = pneg %p136
        %p356 = pneg %p160
        %p357 = pneg %p157
        %p358 = pneg %p186
        %p359 = pneg %p183
        %s360 = sand.u32 %s173, 1
        %s361 = scalar_lea.sflag [#allocation5], %s360
        %s362 = sand.u32 %s173, 1
        %s363 = smul.addr %s362, 64
        %s364 = scalar_lea.vmem [#allocation11], %s363
        %s365 = smul.u32 8, %s32
        %s366 = smul.u32 16, %s33
        %s367 = smul.u32 8, %s32
        %p369 = scmp.eq.s32.totalorder %s33, 0
        // Predicated region
        $region57: #{tpu_custom_call.1} parent=39 // pred_check
          %p370 = pneg %p369
        $region58: #{tpu_custom_call.1} parent=39 // pred_check_branch
          %372 = sbr.rel (%p370) target = $region60
        $region59: #{tpu_custom_call.1} parent=39 // pred_region
          %373 = vst [vmem:[#allocation2] sm:$0xff] 0.0
          %374 = vst [vmem:[#allocation2 + $0x8] sm:$0xff] 0.0
          %375 = vst [vmem:[#allocation2 + $0x10] sm:$0xff] 0.0
          %376 = vst [vmem:[#allocation2 + $0x18] sm:$0xff] 0.0
          %377 = vst [vmem:[#allocation2 + $0x20] sm:$0xff] 0.0
          %378 = vst [vmem:[#allocation2 + $0x28] sm:$0xff] 0.0
          %379 = vst [vmem:[#allocation2 + $0x30] sm:$0xff] 0.0
          %380 = vst [vmem:[#allocation2 + $0x38] sm:$0xff] 0.0
        $region60: #{tpu_custom_call.1} parent=39 // pred_fallthru
          _
        %v381 = vld [vmem:[%s298] sm:$0xf]
        %v382 = vld [vmem:[%s298 + $0x4] sm:$0xf]
        %v383 = vld [vmem:[%s298 + $0x8] sm:$0xf]
        %v384 = vld [vmem:[%s298 + $0xc] sm:$0xf]
        %v385 = vld [vmem:[%s298 + $0x10] sm:$0xf]
        %v386 = vld [vmem:[%s298 + $0x14] sm:$0xf]
        %v387 = vld [vmem:[%s298 + $0x18] sm:$0xf]
        %v388 = vld [vmem:[%s298 + $0x1c] sm:$0xf]
        %v389 = vld [vmem:[%s307] sm:$0xf]
        %v390 = vld [vmem:[%s307 + $0x4] sm:$0xf]
        %v391 = vld [vmem:[%s307 + $0x8] sm:$0xf]
        %v392 = vld [vmem:[%s307 + $0xc] sm:$0xf]
        %v393 = vld [vmem:[%s307 + $0x10] sm:$0xf]
        %v394 = vld [vmem:[%s307 + $0x14] sm:$0xf]
        %v395 = vld [vmem:[%s307 + $0x18] sm:$0xf]
        %v396 = vld [vmem:[%s307 + $0x1c] sm:$0xf]
        %v397 = vld [vmem:[%s307 + $0x20] sm:$0xf]
        %v398 = vld [vmem:[%s307 + $0x24] sm:$0xf]
        %v399 = vld [vmem:[%s307 + $0x28] sm:$0xf]
        %v400 = vld [vmem:[%s307 + $0x2c] sm:$0xf]
        %v401 = vld [vmem:[%s307 + $0x30] sm:$0xf]
        %v402 = vld [vmem:[%s307 + $0x34] sm:$0xf]
        %v403 = vld [vmem:[%s307 + $0x38] sm:$0xf]
        %v404 = vld [vmem:[%s307 + $0x3c] sm:$0xf]
        %v405 = vld [vmem:[%s315] sm:$0x1]
        %v407 = vlaneseq
        %v408 = vshrl.u32 %v407, 7
        %v409 = vsub.s32 0, %v408
        %v410 = vrot.slane %v405, %v409
        %v420 = vunpack.c.l.b16 %v381
        %v421 = vunpack.c.l.b16 %v382
        %v422 = vunpack.c.l.b16 %v383
        %v423 = vunpack.c.l.b16 %v384
        %v424 = vunpack.c.l.b16 %v385
        %v425 = vunpack.c.l.b16 %v386
        %v426 = vunpack.c.l.b16 %v387
        %v427 = vunpack.c.l.b16 %v388
        %v428 = vpack.c.b16 %v421, %v420
        %v429 = vpack.c.b16 %v423, %v422
        %v430 = vpack.c.b16 %v425, %v424
        %v431 = vpack.c.b16 %v427, %v426
        %v452 = vunpack.c.l.b16 %v389
        %v453 = vunpack.c.l.b16 %v390
        %v454 = vunpack.c.l.b16 %v391
        %v455 = vunpack.c.l.b16 %v392
        %v456 = vunpack.c.l.b16 %v393
        %v457 = vunpack.c.l.b16 %v394
        %v458 = vunpack.c.l.b16 %v395
        %v459 = vunpack.c.l.b16 %v396
        %v460 = vunpack.c.l.b16 %v397
        %v461 = vunpack.c.l.b16 %v398
        %v462 = vunpack.c.l.b16 %v399
        %v463 = vunpack.c.l.b16 %v400
        %v464 = vunpack.c.l.b16 %v401
        %v465 = vunpack.c.l.b16 %v402
        %v466 = vunpack.c.l.b16 %v403
        %v467 = vunpack.c.l.b16 %v404
        %v468 = vpack.c.b16 %v453, %v452
        %v469 = vpack.c.b16 %v455, %v454
        %v470 = vpack.c.b16 %v457, %v456
        %v471 = vpack.c.b16 %v459, %v458
        %v472 = vpack.c.b16 %v461, %v460
        %v473 = vpack.c.b16 %v463, %v462
        %v474 = vpack.c.b16 %v465, %v464
        %v475 = vpack.c.b16 %v467, %v466
        %484 = vmatprep.subr.bf16.mxu0 0
        %485 = vmatpush1.bf16.msra.mxu0 %v475
        %486 = vmatprep.subr.bf16.mxu0 0
        %487 = vmatpush1.bf16.msra.mxu0 %v474
        %488 = vmatprep.subr.bf16.mxu0 0
        %489 = vmatpush1.bf16.msra.mxu0 %v473
        %490 = vmatprep.subr.bf16.mxu0 0
        %491 = vmatpush1.bf16.msra.mxu0 %v472
        %492 = vmatprep.subr.bf16.mxu0 0
        %493 = vmatpush1.bf16.msra.mxu0 %v471
        %494 = vmatprep.subr.bf16.mxu0 0
        %495 = vmatpush1.bf16.msra.mxu0 %v470
        %496 = vmatprep.subr.bf16.mxu0 0
        %497 = vmatpush1.bf16.msra.mxu0 %v469
        %498 = vmatprep.subr.bf16.mxu0 0
        %499 = vmatpush1.bf16.msra.mxu0 %v468
        %500 = vmatprep.subr.bf16.mxu0 0
        %501 = vmatpush2.bf16.msra.mxu0 0
        %502 = vmatprep.subr.bf16.mxu0 0
        %503 = vmatpush2.bf16.msra.mxu0 0
        %504 = vmatprep.subr.bf16.mxu0 0
        %505 = vmatpush2.bf16.msra.mxu0 0
        %506 = vmatprep.subr.bf16.mxu0 0
        %507 = vmatpush2.bf16.msra.mxu0 0
        %508 = vmatprep.subr.bf16.mxu0 0
        %509 = vmatpush2.bf16.msra.mxu0 0
        %510 = vmatprep.subr.bf16.mxu0 0
        %511 = vmatpush2.bf16.msra.mxu0 0
        %512 = vmatprep.subr.bf16.mxu0 0
        %513 = vmatpush2.bf16.msra.mxu0 0
        %514 = vmatprep.subr.bf16.mxu0 0
        %515 = vmatpush2.bf16.msra.mxu0 0
        %516 = vmatprep.mubr.bf16.mxu0 0
        %517 = vmatmul.mubr.bf16.gmra.mxu0 %v428
        %v518 = vpop.f32.mrf.mxu0
        %v519 = vadd.f32 %v410, %v518
        %v520 = vpop.f32.mrf.mxu0
        %v521 = vpop.f32.mrf.mxu0
        %v522 = vadd.f32 %v410, %v521
        %v523 = vpop.f32.mrf.mxu0
        %524 = vmatprep.mubr.bf16.mxu0 0
        %525 = vmatmul.mubr.bf16.gmra.mxu0 %v429
        %v526 = vpop.f32.mrf.mxu0
        %v527 = vadd.f32 %v410, %v526
        %v528 = vpop.f32.mrf.mxu0
        %v529 = vpop.f32.mrf.mxu0
        %v530 = vadd.f32 %v410, %v529
        %v531 = vpop.f32.mrf.mxu0
        %532 = vmatprep.mubr.bf16.mxu0 0
        %533 = vmatmul.mubr.bf16.gmra.mxu0 %v430
        %v534 = vpop.f32.mrf.mxu0
        %v535 = vadd.f32 %v410, %v534
        %v536 = vpop.f32.mrf.mxu0
        %v537 = vpop.f32.mrf.mxu0
        %v538 = vadd.f32 %v410, %v537
        %v539 = vpop.f32.mrf.mxu0
        %540 = vmatprep.mubr.bf16.mxu0 0
        %541 = vmatmul.mubr.bf16.gmra.mxu0 %v431
        %v542 = vpop.f32.mrf.mxu0
        %v543 = vadd.f32 %v410, %v542
        %v544 = vpop.f32.mrf.mxu0
        %v545 = vpop.f32.mrf.mxu0
        %v546 = vadd.f32 %v410, %v545
        %v547 = vpop.f32.mrf.mxu0
        %548 = vdwg.mxu0
        %v549 = vmax.f32 %v519, 0.0
        %v550 = vmax.f32 %v522, 0.0
        %v551 = vmax.f32 %v527, 0.0
        %v552 = vmax.f32 %v530, 0.0
        %v553 = vmax.f32 %v535, 0.0
        %v554 = vmax.f32 %v538, 0.0
        %v555 = vmax.f32 %v543, 0.0
        %v556 = vmax.f32 %v546, 0.0
        %v557 = vmul.f32 %v549, %v549
        %v558 = vmul.f32 %v550, %v550
        %v559 = vmul.f32 %v551, %v551
        %v560 = vmul.f32 %v552, %v552
        %v561 = vmul.f32 %v553, %v553
        %v562 = vmul.f32 %v554, %v554
        %v563 = vmul.f32 %v555, %v555
        %v564 = vmul.f32 %v556, %v556
        %v565 = vld [vmem:[#allocation2] sm:$0xff]
        %v566 = vld [vmem:[#allocation2 + $0x8] sm:$0xff]
        %v567 = vld [vmem:[#allocation2 + $0x10] sm:$0xff]
        %v568 = vld [vmem:[#allocation2 + $0x18] sm:$0xff]
        %v569 = vld [vmem:[#allocation2 + $0x20] sm:$0xff]
        %v570 = vld [vmem:[#allocation2 + $0x28] sm:$0xff]
        %v571 = vld [vmem:[#allocation2 + $0x30] sm:$0xff]
        %v572 = vld [vmem:[#allocation2 + $0x38] sm:$0xff]
        %v573 = vpack.c.bf16 %v558, %v557
        %v574 = vpack.c.bf16 %v560, %v559
        %v575 = vpack.c.bf16 %v562, %v561
        %v576 = vpack.c.bf16 %v564, %v563
        %v577 = vld [vmem:[%s324] sm:$0xf]
        %v578 = vld [vmem:[%s324 + $0x4] sm:$0xf]
        %v579 = vld [vmem:[%s324 + $0x8] sm:$0xf]
        %v580 = vld [vmem:[%s324 + $0xc] sm:$0xf]
        %v581 = vld [vmem:[%s324 + $0x10] sm:$0xf]
        %v582 = vld [vmem:[%s324 + $0x14] sm:$0xf]
        %v583 = vld [vmem:[%s324 + $0x18] sm:$0xf]
        %v584 = vld [vmem:[%s324 + $0x1c] sm:$0xf]
        %v585 = vld [vmem:[%s324 + $0x20] sm:$0xf]
        %v586 = vld [vmem:[%s324 + $0x24] sm:$0xf]
        %v587 = vld [vmem:[%s324 + $0x28] sm:$0xf]
        %v588 = vld [vmem:[%s324 + $0x2c] sm:$0xf]
        %v589 = vld [vmem:[%s324 + $0x30] sm:$0xf]
        %v590 = vld [vmem:[%s324 + $0x34] sm:$0xf]
        %v591 = vld [vmem:[%s324 + $0x38] sm:$0xf]
        %v592 = vld [vmem:[%s324 + $0x3c] sm:$0xf]
        %v609 = vunpack.c.l.b16 %v577
        %v610 = vunpack.c.l.b16 %v578
        %v611 = vunpack.c.l.b16 %v579
        %v612 = vunpack.c.l.b16 %v580
        %v613 = vunpack.c.l.b16 %v581
        %v614 = vunpack.c.l.b16 %v582
        %v615 = vunpack.c.l.b16 %v583
        %v616 = vunpack.c.l.b16 %v584
        %v617 = vunpack.c.l.b16 %v585
        %v618 = vunpack.c.l.b16 %v586
        %v619 = vunpack.c.l.b16 %v587
        %v620 = vunpack.c.l.b16 %v588
        %v621 = vunpack.c.l.b16 %v589
        %v622 = vunpack.c.l.b16 %v590
        %v623 = vunpack.c.l.b16 %v591
        %v624 = vunpack.c.l.b16 %v592
        %v625 = vpack.c.b16 %v610, %v609
        %v626 = vpack.c.b16 %v612, %v611
        %v627 = vpack.c.b16 %v614, %v613
        %v628 = vpack.c.b16 %v616, %v615
        %v629 = vpack.c.b16 %v618, %v617
        %v630 = vpack.c.b16 %v620, %v619
        %v631 = vpack.c.b16 %v622, %v621
        %v632 = vpack.c.b16 %v624, %v623
        %641 = vmatprep.subr.bf16.mxu0 0
        %642 = vmatpush1.bf16.msra.mxu0 %v632
        %643 = vmatprep.subr.bf16.mxu0 0
        %644 = vmatpush1.bf16.msra.mxu0 %v631
        %645 = vmatprep.subr.bf16.mxu0 0
        %646 = vmatpush1.bf16.msra.mxu0 %v630
        %647 = vmatprep.subr.bf16.mxu0 0
        %648 = vmatpush1.bf16.msra.mxu0 %v629
        %649 = vmatprep.subr.bf16.mxu0 0
        %650 = vmatpush1.bf16.msra.mxu0 %v628
        %651 = vmatprep.subr.bf16.mxu0 0
        %652 = vmatpush1.bf16.msra.mxu0 %v627
        %653 = vmatprep.subr.bf16.mxu0 0
        %654 = vmatpush1.bf16.msra.mxu0 %v626
        %655 = vmatprep.subr.bf16.mxu0 0
        %656 = vmatpush1.bf16.msra.mxu0 %v625
        %657 = vmatprep.subr.bf16.mxu0 0
        %658 = vmatpush2.bf16.msra.mxu0 0
        %659 = vmatprep.subr.bf16.mxu0 0
        %660 = vmatpush2.bf16.msra.mxu0 0
        %661 = vmatprep.subr.bf16.mxu0 0
        %662 = vmatpush2.bf16.msra.mxu0 0
        %663 = vmatprep.subr.bf16.mxu0 0
        %664 = vmatpush2.bf16.msra.mxu0 0
        %665 = vmatprep.subr.bf16.mxu0 0
        %666 = vmatpush2.bf16.msra.mxu0 0
        %667 = vmatprep.subr.bf16.mxu0 0
        %668 = vmatpush2.bf16.msra.mxu0 0
        %669 = vmatprep.subr.bf16.mxu0 0
        %670 = vmatpush2.bf16.msra.mxu0 0
        %671 = vmatprep.subr.bf16.mxu0 0
        %672 = vmatpush2.bf16.msra.mxu0 0
        %673 = vmatprep.mubr.bf16.mxu0 0
        %674 = vmatmul.mubr.bf16.gmra.mxu0 %v573
        %v675 = vpop.f32.mrf.mxu0
        %v676 = vadd.f32 0.0, %v675
        %v677 = vpop.f32.mrf.mxu0
        %v678 = vpop.f32.mrf.mxu0
        %v679 = vadd.f32 0.0, %v678
        %v680 = vpop.f32.mrf.mxu0
        %681 = vmatprep.mubr.bf16.mxu0 0
        %682 = vmatmul.mubr.bf16.gmra.mxu0 %v574
        %v683 = vpop.f32.mrf.mxu0
        %v684 = vadd.f32 0.0, %v683
        %v685 = vpop.f32.mrf.mxu0
        %v686 = vpop.f32.mrf.mxu0
        %v687 = vadd.f32 0.0, %v686
        %v688 = vpop.f32.mrf.mxu0
        %689 = vmatprep.mubr.bf16.mxu0 0
        %690 = vmatmul.mubr.bf16.gmra.mxu0 %v575
        %v691 = vpop.f32.mrf.mxu0
        %v692 = vadd.f32 0.0, %v691
        %v693 = vpop.f32.mrf.mxu0
        %v694 = vpop.f32.mrf.mxu0
        %v695 = vadd.f32 0.0, %v694
        %v696 = vpop.f32.mrf.mxu0
        %697 = vmatprep.mubr.bf16.mxu0 0
        %698 = vmatmul.mubr.bf16.gmra.mxu0 %v576
        %v699 = vpop.f32.mrf.mxu0
        %v700 = vadd.f32 0.0, %v699
        %v701 = vpop.f32.mrf.mxu0
        %v702 = vpop.f32.mrf.mxu0
        %v703 = vadd.f32 0.0, %v702
        %v704 = vpop.f32.mrf.mxu0
        %705 = vdwg.mxu0
        %v706 = vadd.f32 %v565, %v676
        %v707 = vadd.f32 %v566, %v679
        %v708 = vadd.f32 %v567, %v684
        %v709 = vadd.f32 %v568, %v687
        %v710 = vadd.f32 %v569, %v692
        %v711 = vadd.f32 %v570, %v695
        %v712 = vadd.f32 %v571, %v700
        %v713 = vadd.f32 %v572, %v703
        %714 = vst [vmem:[#allocation2] sm:$0xff] %v706
        %715 = vst [vmem:[#allocation2 + $0x8] sm:$0xff] %v707
        %716 = vst [vmem:[#allocation2 + $0x10] sm:$0xff] %v708
        %717 = vst [vmem:[#allocation2 + $0x18] sm:$0xff] %v709
        %718 = vst [vmem:[#allocation2 + $0x20] sm:$0xff] %v710
        %719 = vst [vmem:[#allocation2 + $0x28] sm:$0xff] %v711
        %720 = vst [vmem:[#allocation2 + $0x30] sm:$0xff] %v712
        %721 = vst [vmem:[#allocation2 + $0x38] sm:$0xff] %v713
        %p722 = scmp.eq.s32.totalorder %s33, 3
        // Predicated region
        $region61: #{tpu_custom_call.1} parent=39 // pred_check
          %p723 = pneg %p722
        $region62: #{tpu_custom_call.1} parent=39 // pred_check_branch
          %725 = sbr.rel (%p723) target = $region64
        $region63: #{tpu_custom_call.1} parent=39 // pred_region
          %v726 = vld [vmem:[#allocation2] sm:$0xff]
          %v727 = vld [vmem:[#allocation2 + $0x8] sm:$0xff]
          %v728 = vld [vmem:[#allocation2 + $0x10] sm:$0xff]
          %v729 = vld [vmem:[#allocation2 + $0x18] sm:$0xff]
          %v730 = vld [vmem:[#allocation2 + $0x20] sm:$0xff]
          %v731 = vld [vmem:[#allocation2 + $0x28] sm:$0xff]
          %v732 = vld [vmem:[#allocation2 + $0x30] sm:$0xff]
          %v733 = vld [vmem:[#allocation2 + $0x38] sm:$0xff]
          %v734 = vld [vmem:[%s4] sm:$0x1]
          %v736 = vlaneseq
          %v737 = vshrl.u32 %v736, 7
          %v738 = vsub.s32 0, %v737
          %v739 = vrot.slane %v734, %v738
          %v741 = vadd.f32 %v726, %v739
          %v742 = vadd.f32 %v727, %v739
          %v743 = vadd.f32 %v728, %v739
          %v744 = vadd.f32 %v729, %v739
          %v745 = vadd.f32 %v730, %v739
          %v746 = vadd.f32 %v731, %v739
          %v747 = vadd.f32 %v732, %v739
          %v748 = vadd.f32 %v733, %v739
          %749 = vst [vmem:[%s364] sm:$0xff] %v741
          %750 = vst [vmem:[%s364 + $0x8] sm:$0xff] %v742
          %751 = vst [vmem:[%s364 + $0x10] sm:$0xff] %v743
          %752 = vst [vmem:[%s364 + $0x18] sm:$0xff] %v744
          %753 = vst [vmem:[%s364 + $0x20] sm:$0xff] %v745
          %754 = vst [vmem:[%s364 + $0x28] sm:$0xff] %v746
          %755 = vst [vmem:[%s364 + $0x30] sm:$0xff] %v747
          %756 = vst [vmem:[%s364 + $0x38] sm:$0xff] %v748
        $region64: #{tpu_custom_call.1} parent=39 // pred_fallthru
          _
        %s757 = sand.u32 %s173, 1
        %s758 = scalar_lea.sflag [#allocation5], %s757
        %s759 = sand.u32 %s173, 1
        %s760 = smul.addr %s759, 64
        %s761 = scalar_lea.vmem [#allocation11], %s760
        // Predicated region
        $region65: #{tpu_custom_call.1} parent=39 // pred_check
          %p762 = pneg %p183
        $region66: #{tpu_custom_call.1} parent=39 // pred_check_branch
          %764 = sbr.rel (%p762) target = $region68
        $region67: #{tpu_custom_call.1} parent=39 // pred_region
          %s765 = smul.u32 8, %s32
          %s767 = ssub.s32 1024, 1024
          %768 = vsyncadd %s758, %s767
          %s769 = smul.addr %s765, 128
          %s770 = scalar_lea.hbm %s5, %s769
          %s771 = sshll.u32 %s761, 4
          %s772 = int_to_ptr.vmem [resolvable:$true] %s771
          %777 = dma.vmem_to_hbm [thread:$0]  %s772, 1024, %s770, %s758, 128, 128, 8
        $region68: #{tpu_custom_call.1} parent=39 // pred_fallthru
          _
      $region40: #{tpu_custom_call.1} parent=5 // pred_fallthru
        _
      %p778 = scmp.le.s32.totalorder 2, %s23
      // Predicated region
      $region69: #{tpu_custom_call.1} parent=5 // pred_check
        %p779 = pneg %p778
      $region70: #{tpu_custom_call.1} parent=5 // pred_check_branch
        %781 = sbr.rel (%p779) target = $region72
      $region71: #{tpu_custom_call.1} parent=5 // pred_region
        %s782 = ssub.s32 %s23, 2
        // Predicated region
        $region73: #{tpu_custom_call.1} parent=71 // pred_check
          %p783 = pneg %p189
        $region74: #{tpu_custom_call.1} parent=71 // pred_check_branch
          %785 = sbr.rel (%p783) target = $region76
        $region75: #{tpu_custom_call.1} parent=71 // pred_region
          %s786 = sand.u32 %s174, 1
          %s787 = scalar_lea.sflag [#allocation5], %s786
          %s788 = sand.u32 %s174, 1
          %s789 = smul.addr %s788, 64
          %s790 = scalar_lea.vmem [#allocation11], %s789
          %791 = dma.done %s787, 1024
        $region76: #{tpu_custom_call.1} parent=71 // pred_fallthru
          _
      $region72: #{tpu_custom_call.1} parent=5 // pred_fallthru
        _
    $region6: #{tpu_custom_call.1} parent=1 // loop_footer
      %s27 = sadd.s32 1, %s23
    $region7: #{tpu_custom_call.1} parent=1 // loop_footer_branch
      %22 = sbr.rel target = $region3
    $region8: #{tpu_custom_call.1} parent=1 // loop_exit
      _
    %792 = vsyncpa [#allocation4], 1
    %s793 = scalar_lea.sflag [#allocation4], 1
    %794 = vsyncpa %s793, 1
    %795 = vsyncpa [#allocation7], 1
    %s796 = scalar_lea.sflag [#allocation7], 1
    %797 = vsyncpa %s796, 1
    %798 = vsyncpa [#allocation10], 1
    %s799 = scalar_lea.sflag [#allocation10], 1
    %800 = vsyncpa %s799, 1
    %801 = vsyncpa [#allocation5], 1
    %s802 = scalar_lea.sflag [#allocation5], 1
    %803 = vsyncpa %s802, 1

</llo_original>
